<compile_context>
chip_gen: v7x
topology: tpu7x:2x2x1
jax: 0.10.0
libtpu: 0.0.40
codegen_flags: <defaults>
</compile_context>

<pallas_src>
import functools

import jax
import jax.numpy as jnp
from jax import lax
from jax.experimental import pallas as pl
from jax.experimental.pallas import tpu as pltpu


def _temporal_avg_pool_kernel(x_ref, o_ref, acc_ref, *, t_total, t_block):
    # x_ref: (bB, bT, bD) input tile; o_ref: (bB, bD) output tile;
    # acc_ref: (bB, bD) f32 accumulator (VMEM scratch, persists across T steps).
    k = pl.program_id(2)
    nk = pl.num_programs(2)

    @pl.when(k == 0)
    def _():
        acc_ref[...] = jnp.zeros_like(acc_ref)

    has_tail = (t_total % t_block) != 0  # static Python bool

    if has_tail:
        # All T blocks except the last are full: plain accumulate, no mask cost.
        @pl.when(k < nk - 1)
        def _():
            acc_ref[...] += jnp.sum(x_ref[...], axis=1, dtype=jnp.float32)

        # Last T block: mask the padded tail so it never pollutes the mean.
        @pl.when(k == nk - 1)
        def _():
            valid = t_total - k * t_block
            t_idx = lax.broadcasted_iota(jnp.int32, (1, t_block, 1), 1)
            x = jnp.where(t_idx < valid, x_ref[...], jnp.zeros((), x_ref.dtype))
            acc_ref[...] += jnp.sum(x, axis=1, dtype=jnp.float32)
    else:
        acc_ref[...] += jnp.sum(x_ref[...], axis=1, dtype=jnp.float32)

    @pl.when(k == nk - 1)
    def _():
        o_ref[...] = (acc_ref[...] * (1.0 / t_total)).astype(o_ref.dtype)


def _align_down(n, a):
    return (n // a) * a


def _default_block_bytes():
    """Per-generation HBM block-byte target (best effort; safe fallback 8 MiB)."""
    try:
        kind = jax.devices()[0].device_kind.lower()
    except Exception:
        return 8 << 20
    if "v5" in kind and ("lite" in kind or "v5e" in kind):
        return 6 << 20   # v5e: ~0.82 TB/s, near roofline already at 4-6 MiB
    if "v7" in kind or "7x" in kind:
        return 14 << 20  # v7x: 3.2 TB/s needs bigger blocks; 64 MiB VMEM cap
    return 8 << 20       # v6e and others


def _choose_blocks(B, T, D, itemsize, block_bytes):
    """Pick (bB, bT, bD) under a byte budget, honoring TPU block-shape rules:
       input  (bB, bT, bD): bT % t_align == 0 or bT == T; bD % 128 == 0 or bD == D
       output (bB, bD):     bB % 8 == 0 or bB == B;       bD % 128 == 0 or bD == D
    """
    # Sub-32-bit dtypes pack along sublanes -> dtype-aware second-minor alignment.
    t_align = max(8, 32 // itemsize)

    # Batch tile: small by default (most of the slab comes from T x D); keeps the
    # output block's second-minor dim legal. Grown below if budget remains.
    bB = B if B <= 8 else 8

    # Feature tile: prefer full D so each (b, t) row is one contiguous DMA chunk;
    # only tile by 128 when a minimal (bB, t_align, D) slab would blow the budget.
    # D-tail padding is safe: the reduction is independent per (b, d) column and
    # out-of-bounds output lanes are discarded on writeback (keep it that way --
    # no cross-lane ops in the kernel).
    if D <= 128 or bB * t_align * D * itemsize <= block_bytes:
        bD = D
    else:
        bD = max(128, _align_down(block_bytes // (bB * t_align * itemsize), 128))
        bD = min(bD, _align_down(D, 128))

    # Time tile: fill the remaining byte budget.
    row_bytes = bB * bD * itemsize
    bT = min(T, max(t_align, _align_down(block_bytes // row_bytes, t_align)))

    # If T and D are fully covered and budget remains, grow bB (multiples of 8).
    if bT == T and bD == D and B > bB:
        fit = block_bytes // (T * D * itemsize)
        if fit >= B:
            bB = B
        elif fit >= 8:
            bB = _align_down(fit, 8)

    # Megacore: keep >= 2 tiles on the "parallel" (B, D) axes when a legal split
    # exists (otherwise one v7x TensorCore idles). No-op on 1-TC chips.
    if -(-B // bB) * -(-D // bD) < 2:
        if bB == B and B >= 16:
            bB = _align_down(B // 2, 8)
        elif bD == D and D % 256 == 0:
            bD = D // 2

    return bB, bT, bD


def temporal_avg_pool(x, *, block_bytes=None):
    """Mean over axis 1 of a (B, T, D) array (== torch.mean(x, dim=1))."""
    B, T, D = x.shape
    itemsize = jnp.dtype(x.dtype).itemsize
    if block_bytes is None:
        block_bytes = _default_block_bytes()

    bB, bT, bD = _choose_blocks(B, T, D, itemsize, block_bytes)
    grid = (pl.cdiv(B, bB), pl.cdiv(D, bD), pl.cdiv(T, bT))

    kernel = functools.partial(_temporal_avg_pool_kernel, t_total=T, t_block=bT)

    cost = pl.CostEstimate(
        flops=B * T * D,
        transcendentals=0,
        bytes_accessed=B * T * D * itemsize + B * D * itemsize,
    )

    # Double-buffered input + double-buffered output + f32 accumulator.
    in_bytes = bB * bT * bD * itemsize
    out_bytes = bB * bD * itemsize
    vmem_needed = 2 * in_bytes + 2 * out_bytes + bB * bD * 4
    # Only raise the scoped-VMEM limit when the blocks actually need it (smallest
    # default across generations is 16 MiB on v5e); cap well under v7x's 64 MiB.
    vmem_limit = None
    if vmem_needed + (2 << 20) > (16 << 20):
        vmem_limit = int(min(vmem_needed + (8 << 20), 48 << 20))

    return pl.pallas_call(
        kernel,
        out_shape=jax.ShapeDtypeStruct((B, D), x.dtype),
        grid_spec=pltpu.PrefetchScalarGridSpec(
            num_scalar_prefetch=0,
            grid=grid,
            in_specs=[pl.BlockSpec((bB, bT, bD), lambda i, j, k: (i, k, j))],
            out_specs=pl.BlockSpec((bB, bD), lambda i, j, k: (i, j)),
            scratch_shapes=[pltpu.VMEM((bB, bD), jnp.float32)],
        ),
        compiler_params=pltpu.CompilerParams(
            dimension_semantics=("parallel", "parallel", "arbitrary"),
            vmem_limit_bytes=vmem_limit,
        ),
        cost_estimate=cost,
    )(x)


if __name__ == "__main__":
    key = jax.random.PRNGKey(0)
    k_small, k_big = jax.random.split(key)

    # Small shape matching the module's expected (batch, time, hidden) input.
    B, T, D = 2, 8, 32
    x = jax.random.normal(k_small, (B, T, D), dtype=jnp.float32)
    out = jax.block_until_ready(temporal_avg_pool(x))
    ref = jnp.mean(x, axis=1)
    assert out.shape == (B, D), out.shape
    assert jnp.allclose(out, ref, atol=1e-5, rtol=1e-5), "mismatch vs reference"

    # Bigger shape: default path (full-T block, D split for 2 parallel tiles).
    B2, T2, D2 = 3, 700, 256
    x2 = jax.random.normal(k_big, (B2, T2, D2), dtype=jnp.float32)
    out2 = jax.block_until_ready(temporal_avg_pool(x2))
    ref2 = jnp.mean(x2, axis=1)
    assert out2.shape == (B2, D2), out2.shape
    assert jnp.allclose(out2, ref2, atol=1e-5, rtol=1e-5), "mismatch (default path)"

    # Same shape with a tiny byte budget to force T tiling, the accumulator
    # path, and the gated last-step tail masking.
    out3 = jax.block_until_ready(temporal_avg_pool(x2, block_bytes=256 * 1024))
    assert jnp.allclose(out3, ref2, atol=1e-5, rtol=1e-5), "mismatch (tiled T path)"

    print("KERNEL_OK")
</pallas_src>

<mosaic_0001>
module attributes {stable_mosaic.version = 11 : i64} {
  func.func @_temporal_avg_pool_kernel(%arg0: i32, %arg1: i32, %arg2: i32, %arg3: memref<2x8x32xf32, #tpu.memory_space<vmem>>, %arg4: memref<2x32xf32, #tpu.memory_space<vmem>>, %arg5: memref<2x32xf32, #tpu.memory_space<vmem>>) attributes {dimension_semantics = [#tpu.dimension_semantics<parallel>, #tpu.dimension_semantics<parallel>, #tpu.dimension_semantics<arbitrary>], iteration_bounds = array<i64: 1, 1, 1>, scalar_prefetch = 0 : i64, scratch_operands = 1 : i64, tpu.core_type = #tpu.core_type<tc>, window_params = [{transform_indices = @transform_0, window_bounds = array<i64: 2, 8, 32>}, {transform_indices = @transform_1, window_bounds = array<i64: 2, 32>}]} {
    %c0_i32 = arith.constant 0 : i32
    %0 = arith.cmpi eq, %arg2, %c0_i32 : i32
    %1 = arith.extui %0 : i1 to i32
    %c0_i32_0 = arith.constant 0 : i32
    %2 = arith.cmpi ne, %1, %c0_i32_0 : i32
    scf.if %2 {
      %cst_9 = arith.constant 0.000000e+00 : f32
      %11 = vector.broadcast %cst_9 : f32 to vector<2x32xf32>
      %c0_10 = arith.constant 0 : index
      %c0_11 = arith.constant 0 : index
      %12 = vector.load %arg5[%c0_10, %c0_11] : memref<2x32xf32, #tpu.memory_space<vmem>>, vector<2x32xf32>
      tpu.vector_store %arg5[%c0_10, %c0_11], %11 {strides = array<i32>} : memref<2x32xf32, #tpu.memory_space<vmem>>, vector<2x32xf32>,
    } else {
    }
    %c0 = arith.constant 0 : index
    %c0_1 = arith.constant 0 : index
    %3 = vector.load %arg5[%c0, %c0_1] : memref<2x32xf32, #tpu.memory_space<vmem>>, vector<2x32xf32>
    %c0_2 = arith.constant 0 : index
    %c0_3 = arith.constant 0 : index
    %c0_4 = arith.constant 0 : index
    %4 = vector.load %arg3[%c0_2, %c0_3, %c0_4] : memref<2x8x32xf32, #tpu.memory_space<vmem>>, vector<2x8x32xf32>
    %cst = arith.constant dense<0.000000e+00> : vector<2x32xf32>
    %5 = vector.multi_reduction <add>, %4, %cst [1] : vector<2x8x32xf32> to vector<2x32xf32>
    %6 = arith.addf %3, %5 : vector<2x32xf32>
    %c0_5 = arith.constant 0 : index
    %c0_6 = arith.constant 0 : index
    %7 = vector.load %arg5[%c0_5, %c0_6] : memref<2x32xf32, #tpu.memory_space<vmem>>, vector<2x32xf32>
    tpu.vector_store %arg5[%c0_5, %c0_6], %6 {strides = array<i32>} : memref<2x32xf32, #tpu.memory_space<vmem>>, vector<2x32xf32>,
    %c0_i32_7 = arith.constant 0 : i32
    %8 = arith.cmpi eq, %arg2, %c0_i32_7 : i32
    %9 = arith.extui %8 : i1 to i32
    %c0_i32_8 = arith.constant 0 : i32
    %10 = arith.cmpi ne, %9, %c0_i32_8 : i32
    scf.if %10 {
      %c0_9 = arith.constant 0 : index
      %c0_10 = arith.constant 0 : index
      %11 = vector.load %arg5[%c0_9, %c0_10] : memref<2x32xf32, #tpu.memory_space<vmem>>, vector<2x32xf32>
      %cst_11 = arith.constant 1.250000e-01 : f32
      %12 = vector.broadcast %cst_11 : f32 to vector<2x32xf32>
      %13 = arith.mulf %11, %12 : vector<2x32xf32>
      %c0_12 = arith.constant 0 : index
      %c0_13 = arith.constant 0 : index
      %14 = vector.load %arg4[%c0_12, %c0_13] : memref<2x32xf32, #tpu.memory_space<vmem>>, vector<2x32xf32>
      tpu.vector_store %arg4[%c0_12, %c0_13], %13 {strides = array<i32>} : memref<2x32xf32, #tpu.memory_space<vmem>>, vector<2x32xf32>,
    } else {
    }
    return
  }
  func.func @transform_0(%arg0: i32, %arg1: i32, %arg2: i32) -> (i32, i32, i32) {
    %c0_i32 = arith.constant 0 : i32
    return %arg0, %arg2, %arg1 : i32, i32, i32
  }
  func.func @transform_1(%arg0: i32, %arg1: i32, %arg2: i32) -> (i32, i32) {
    %c0_i32 = arith.constant 0 : i32
    return %arg0, %arg1 : i32, i32
  }
}

</mosaic_0001>

<llo_original>
// kernel: tpu_custom_call.1
$region0: #{tpu_custom_call.1}
  #allocation0 [shape = 'u32[]', space=smem, size = 0x4, offset = 0x4, fixed_abs, tag = 'smem constant byte address 0x4 - core index']
  #allocation1 [shape = 'u32[144,128]{1,0:T(1,128)}', space=vmem, size = 0x12000, scoped, tag = 'internal scratch']
  #allocation2 [shape = 'f32[2,32]{1,0:T(2,128)}', space=vmem, size = 0x400, scoped, tag = 'scratch operand']
  %s0 = inlined_call_operand.hbm [shape: f32[2,8,32], index: 0, kind: input, shape index: {}]
  %s1 = inlined_call_operand.hbm [shape: f32[2,32], index: 1, kind: output, shape index: {}]
  %s2 = sld [smem:[#allocation0]]
  $region26: #{tpu_custom_call.1} parent=0
    _
  %s4 = ssub.s32 1, %s2
  %s5 = scalar_select 0, %s4, %s2
  $region1: #{tpu_custom_call.1} parent=0
    #allocation3 [shape = 'u8[8192]{0}', space=vmem, size = 0x2000, scoped, tag = 'input window, operand 0, single buffered']
    #allocation4 [shape = 's32[1]{0}', space=sflag, size = 0x4, scoped, tag = 'scoped memory for tpu_custom_call.1']
    #allocation5 [shape = 's32[1]{0}', space=sflag, size = 0x4, scoped, tag = 'scoped memory for tpu_custom_call.1']
    #allocation6 [shape = 'u8[1024]{0}', space=vmem, size = 0x400, scoped, tag = 'output window, operand 0, single buffered']
    %6 = vsyncpa [#allocation4], 0
    %7 = vsyncpa [#allocation5], 0
    // Predicated region
    $region2: #{tpu_custom_call.1} parent=1 // pred_check
      _
    $region3: #{tpu_custom_call.1} parent=1 // pred_check_branch
      %9 = sbr.rel (0) target = $region5
    $region4: #{tpu_custom_call.1} parent=1 // pred_region
      %s11 = ssub.s32 256, 256
      %12 = vsyncadd [#allocation4], %s11
      %s13 = sshll.u32 [#allocation3], 4
      %s14 = int_to_ptr.vmem [resolvable:$true] %s13
      %19 = dma.hbm_to_vmem [thread:$0]  %s0, 256, %s14, [#allocation4], 128, 128, 8
    $region5: #{tpu_custom_call.1} parent=1 // pred_fallthru
      _
    // Predicated region
    $region6: #{tpu_custom_call.1} parent=1 // pred_check
      _
    $region7: #{tpu_custom_call.1} parent=1 // pred_check_branch
      %21 = sbr.rel (0) target = $region9
    $region8: #{tpu_custom_call.1} parent=1 // pred_region
      %22 = dma.done [#allocation4], 256
    $region9: #{tpu_custom_call.1} parent=1 // pred_fallthru
      _
    %p23 = scmp.eq.s32.totalorder 0, 0
    // Predicated region
    $region10: #{tpu_custom_call.1} parent=1 // pred_check
      %p24 = pneg %p23
    $region11: #{tpu_custom_call.1} parent=1 // pred_check_branch
      %26 = sbr.rel (%p24) target = $region13
    $region12: #{tpu_custom_call.1} parent=1 // pred_region
      %vm27 = vcmask 254976
      %28 = vst.msk [vmem:[#allocation2] sm:$0x3] %vm27, 0.0
    $region13: #{tpu_custom_call.1} parent=1 // pred_fallthru
      _
    %v29 = vld [vmem:[#allocation2] sm:$0x3]
    %v30 = vld [vmem:[#allocation3] sm:$0xff]
    %v31 = vld [vmem:[#allocation3 + $0x8] sm:$0xff]
    %vm32 = vcmask 261120
    %v33 = vsel %vm32, %v30, 0.0
    %v34 = vrot.slane %v33, 4
    %v35 = vadd.f32 %v33, %v34
    %v36 = vrot.slane %v35, 2
    %v37 = vadd.f32 %v35, %v36
    %v38 = vrot.slane %v37, 1
    %v39 = vadd.f32 %v37, %v38
    %v40 = vsel %vm32, %v31, 0.0
    %v41 = vrot.slane %v40, 4
    %v42 = vadd.f32 %v40, %v41
    %v43 = vrot.slane %v42, 2
    %v44 = vadd.f32 %v42, %v43
    %v45 = vrot.slane %v44, 1
    %v46 = vadd.f32 %v44, %v45
    %vm49 = vcmask 1041409
    %v50 = vsel %vm49, %v46, %v39
    %v52 = vadd.f32 %v29, %v50
    %vm53 = vcmask 254976
    %54 = vst.msk [vmem:[#allocation2] sm:$0x3] %vm53, %v52
    // Predicated region
    $region14: #{tpu_custom_call.1} parent=1 // pred_check
      %p55 = pneg %p23
    $region15: #{tpu_custom_call.1} parent=1 // pred_check_branch
      %57 = sbr.rel (%p55) target = $region17
    $region16: #{tpu_custom_call.1} parent=1 // pred_region
      %v58 = vld [vmem:[#allocation2] sm:$0x3]
      %v59 = vmul.f32 %v58, 0.125
      %60 = vst.msk [vmem:[#allocation6] sm:$0x3] %vm53, %v59
    $region17: #{tpu_custom_call.1} parent=1 // pred_fallthru
      _
    // Predicated region
    $region18: #{tpu_custom_call.1} parent=1 // pred_check
      _
    $region19: #{tpu_custom_call.1} parent=1 // pred_check_branch
      %62 = sbr.rel (0) target = $region21
    $region20: #{tpu_custom_call.1} parent=1 // pred_region
      %s64 = ssub.s32 32, 32
      %65 = vsyncadd [#allocation5], %s64
      %s67 = sshll.u32 [#allocation6], 4
      %s68 = int_to_ptr.vmem [resolvable:$true] %s67
      %70 = dma.vmem_to_hbm [thread:$0]  %s68, 32, %s1, [#allocation5]
    $region21: #{tpu_custom_call.1} parent=1 // pred_fallthru
      _
    // Predicated region
    $region22: #{tpu_custom_call.1} parent=1 // pred_check
      _
    $region23: #{tpu_custom_call.1} parent=1 // pred_check_branch
      %72 = sbr.rel (0) target = $region25
    $region24: #{tpu_custom_call.1} parent=1 // pred_region
      %73 = dma.done [#allocation5], 32
    $region25: #{tpu_custom_call.1} parent=1 // pred_fallthru
      _
    %74 = vsyncpa [#allocation4], 1
    %75 = vsyncpa [#allocation5], 1

</llo_original>
